<compile_context>
chip_gen: v7x
topology: tpu7x:2x2x1
jax: 0.10.0
libtpu: 0.0.40
codegen_flags: <defaults>
</compile_context>

<pallas_src>
import jax
import jax.numpy as jnp
from jax.experimental import pallas as pl
from jax.experimental.pallas import tpu as pltpu

_LANE = 128    # lane width / MXU dimension
_TM = 128      # token rows per grid block
_NEG = -1e30   # fill for padded vocab columns (exp() underflows to exactly 0)


def _round_up(x, m):
    return (x + m - 1) // m * m


def _bigram_loss_kernel(idx_ref, tgt_ref, table_ref, logits_ref, nll_ref):
    idx = idx_ref[...]        # (TM, 1)  int32
    tgt = tgt_ref[...]        # (TM, 1)  int32
    table = table_ref[...]    # (VP, VP) f32, padded columns = _NEG
    tm = idx.shape[0]
    vp = table.shape[1]

    # Embedding lookup as a one-hot matmul on the MXU (V is tiny here).
    col = jax.lax.broadcasted_iota(jnp.int32, (tm, vp), 1)
    one_hot = (col == idx).astype(jnp.float32)                        # (TM, VP)
    logits = jnp.dot(one_hot, table, preferred_element_type=jnp.float32)
    logits_ref[...] = logits                                          # lane-dense store

    # Numerically stable per-row cross-entropy; padded columns are ~ -inf.
    m = jnp.max(logits, axis=-1, keepdims=True)
    z = logits - m
    lse = jnp.log(jnp.sum(jnp.exp(z), axis=-1, keepdims=True)) + m    # (TM, 1)
    tgt_onehot = (col == tgt).astype(jnp.float32)
    tgt_logit = jnp.sum(logits * tgt_onehot, axis=-1, keepdims=True)  # (TM, 1)
    nll_ref[...] = lse - tgt_logit


def _bigram_logits_kernel(idx_ref, table_ref, logits_ref):
    idx = idx_ref[...]
    table = table_ref[...]
    tm = idx.shape[0]
    vp = table.shape[1]
    col = jax.lax.broadcasted_iota(jnp.int32, (tm, vp), 1)
    one_hot = (col == idx).astype(jnp.float32)
    logits_ref[...] = jnp.dot(one_hot, table, preferred_element_type=jnp.float32)


def bigram_forward(idx, table, targets=None):
    """Mirrors BigramLanguageModel.forward.

    targets is None  -> returns (logits (B, T, V), None)
    targets provided -> returns (logits (B*T, V), scalar loss)   [PyTorch view]
    """
    B, T = idx.shape
    V = table.shape[0]
    BT = B * T
    v_pad = _round_up(V, _LANE)
    bt_pad = _round_up(max(BT, 1), _TM)
    n_blocks = bt_pad // _TM

    # Lane-dense padded table; padded columns = big negative so they are inert
    # in the in-kernel logsumexp and get sliced off in the wrapper.
    table_p = jnp.full((v_pad, v_pad), _NEG, dtype=jnp.float32)
    table_p = table_p.at[:V, :V].set(table.astype(jnp.float32))

    idx_flat = jnp.zeros((bt_pad, 1), jnp.int32).at[:BT, 0].set(
        idx.reshape(BT).astype(jnp.int32))

    idx_spec = pl.BlockSpec((_TM, 1), lambda i: (i, 0))
    table_spec = pl.BlockSpec((v_pad, v_pad), lambda i: (0, 0))   # resident block
    logits_spec = pl.BlockSpec((_TM, v_pad), lambda i: (i, 0))
    nll_spec = pl.BlockSpec((_TM, 1), lambda i: (i, 0))

    # VMEM budget: table (x2 buffers) + double-buffered logits block + small
    # idx/tgt/nll blocks + headroom.  Re-derive if V grows (v7x: 64 MiB VMEM).
    vmem_bytes = (2 * v_pad * v_pad * 4 + 2 * _TM * v_pad * 4
                  + 2 * 3 * _TM * 4 + (4 << 20))
    compiler_params = pltpu.CompilerParams(
        dimension_semantics=("parallel",),
        vmem_limit_bytes=int(vmem_bytes))

    if targets is None:
        cost = pl.CostEstimate(
            flops=2 * bt_pad * v_pad * v_pad,
            transcendentals=0,
            bytes_accessed=bt_pad * 4 + v_pad * v_pad * 4 + bt_pad * v_pad * 4)
        logits_p = pl.pallas_call(
            _bigram_logits_kernel,
            out_shape=jax.ShapeDtypeStruct((bt_pad, v_pad), jnp.float32),
            grid=(n_blocks,),
            in_specs=[idx_spec, table_spec],
            out_specs=logits_spec,
            compiler_params=compiler_params,
            cost_estimate=cost,
        )(idx_flat, table_p)
        return logits_p[:BT, :V].reshape(B, T, V), None

    tgt_flat = jnp.zeros((bt_pad, 1), jnp.int32).at[:BT, 0].set(
        targets.reshape(BT).astype(jnp.int32))

    cost = pl.CostEstimate(
        flops=2 * bt_pad * v_pad * v_pad,
        transcendentals=bt_pad * v_pad + bt_pad,
        bytes_accessed=(2 * bt_pad * 4 + v_pad * v_pad * 4
                        + bt_pad * v_pad * 4 + bt_pad * 4))

    logits_p, nll_p = pl.pallas_call(
        _bigram_loss_kernel,
        out_shape=(jax.ShapeDtypeStruct((bt_pad, v_pad), jnp.float32),
                   jax.ShapeDtypeStruct((bt_pad, 1), jnp.float32)),
        grid=(n_blocks,),
        in_specs=[idx_spec, idx_spec, table_spec],
        out_specs=(logits_spec, nll_spec),
        compiler_params=compiler_params,
        cost_estimate=cost,
    )(idx_flat, tgt_flat, table_p)

    logits = logits_p[:BT, :V]                  # PyTorch returns the (B*T, C) view
    loss = jnp.sum(nll_p[:BT, 0]) / BT          # mean over the valid rows
    return logits, loss


def ref_forward(idx, table, targets=None):
    """Pure-JAX reference mirroring the PyTorch semantics."""
    logits = table[idx]                                   # (B, T, V)
    if targets is None:
        return logits, None
    B, T, V = logits.shape
    lf = logits.reshape(B * T, V).astype(jnp.float32)
    tf = targets.reshape(B * T)
    logz = jax.scipy.special.logsumexp(lf, axis=-1)
    loss = jnp.mean(logz - lf[jnp.arange(B * T), tf])
    return lf, loss


if __name__ == "__main__":
    # Vocab built like the original script (chars of a small in-script text).
    text = "hello pallas world! this is a tiny bigram model."
    chars = sorted(list(set(text)))
    vocab_size = len(chars)

    key = jax.random.PRNGKey(0)
    k_table, k_idx, k_tgt, k_idx2, k_tgt2 = jax.random.split(key, 5)

    # nn.Embedding(vocab_size, vocab_size) weights ~ N(0, 1).
    table = jax.random.normal(k_table, (vocab_size, vocab_size), dtype=jnp.float32)

    # ---- small shape implied by the module (B=2, T=8) ----
    B, T = 2, 8
    idx = jax.random.randint(k_idx, (B, T), 0, vocab_size, dtype=jnp.int32)
    targets = jax.random.randint(k_tgt, (B, T), 0, vocab_size, dtype=jnp.int32)

    logits, loss = bigram_forward(idx, table, targets)
    logits = jax.block_until_ready(logits)
    loss = jax.block_until_ready(loss)

    ref_logits, ref_loss = ref_forward(idx, table, targets)
    assert logits.shape == (B * T, vocab_size)
    assert jnp.allclose(logits, ref_logits, atol=1e-5)
    assert jnp.allclose(loss, ref_loss, atol=1e-5, rtol=1e-5)

    # targets=None path: loss is None, logits stay (B, T, V), no loss compute.
    logits_only, loss_none = bigram_forward(idx, table, None)
    logits_only = jax.block_until_ready(logits_only)
    assert loss_none is None
    assert logits_only.shape == (B, T, vocab_size)
    assert jnp.allclose(logits_only, ref_forward(idx, table, None)[0], atol=1e-5)

    # ---- multi-block path (exercises the BT grid: 3 blocks of 128 rows) ----
    B2, T2 = 4, 96
    idx2 = jax.random.randint(k_idx2, (B2, T2), 0, vocab_size, dtype=jnp.int32)
    tgt2 = jax.random.randint(k_tgt2, (B2, T2), 0, vocab_size, dtype=jnp.int32)
    logits2, loss2 = bigram_forward(idx2, table, tgt2)
    logits2 = jax.block_until_ready(logits2)
    loss2 = jax.block_until_ready(loss2)
    ref_logits2, ref_loss2 = ref_forward(idx2, table, tgt2)
    assert jnp.allclose(logits2, ref_logits2, atol=1e-5)
    assert jnp.allclose(loss2, ref_loss2, atol=1e-4, rtol=1e-5)

    print("KERNEL_OK")
</pallas_src>

<mosaic_0001>
module attributes {stable_mosaic.version = 11 : i64} {
  func.func @_bigram_loss_kernel(%arg0: i32, %arg1: memref<128x1xi32, #tpu.memory_space<vmem>>, %arg2: memref<128x1xi32, #tpu.memory_space<vmem>>, %arg3: memref<128x128xf32, #tpu.memory_space<vmem>>, %arg4: memref<128x128xf32, #tpu.memory_space<vmem>>, %arg5: memref<128x1xf32, #tpu.memory_space<vmem>>) attributes {dimension_semantics = [#tpu.dimension_semantics<parallel>], iteration_bounds = array<i64: 1>, scalar_prefetch = 0 : i64, scratch_operands = 0 : i64, tpu.core_type = #tpu.core_type<tc>, window_params = [{transform_indices = @transform_0, window_bounds = array<i64: 128, 1>}, {transform_indices = @transform_1, window_bounds = array<i64: 128, 1>}, {pipeline_mode = #tpu.pipeline_mode<synchronous>, transform_indices = @transform_2, window_bounds = array<i64: 128, 128>}, {transform_indices = @transform_3, window_bounds = array<i64: 128, 128>}, {transform_indices = @transform_4, window_bounds = array<i64: 128, 1>}]} {
    %c0 = arith.constant 0 : index
    %c0_0 = arith.constant 0 : index
    %0 = vector.load %arg1[%c0, %c0_0] : memref<128x1xi32, #tpu.memory_space<vmem>>, vector<128x1xi32>
    %c0_1 = arith.constant 0 : index
    %c0_2 = arith.constant 0 : index
    %1 = vector.load %arg2[%c0_1, %c0_2] : memref<128x1xi32, #tpu.memory_space<vmem>>, vector<128x1xi32>
    %c0_3 = arith.constant 0 : index
    %c0_4 = arith.constant 0 : index
    %2 = vector.load %arg3[%c0_3, %c0_4] : memref<128x128xf32, #tpu.memory_space<vmem>>, vector<128x128xf32>
    %3 = tpu.iota {dimensions = array<i32: 1>} : vector<128x128xi32>
    %4 = vector.broadcast %0 : vector<128x1xi32> to vector<128x128xi32>
    %5 = arith.cmpi eq, %3, %4 : vector<128x128xi32>
    %6 = arith.extui %5 : vector<128x128xi1> to vector<128x128xi32>
    %7 = arith.sitofp %6 : vector<128x128xi32> to vector<128x128xf32>
    %cst = arith.constant dense<0.000000e+00> : vector<128x128xf32>
    %8 = tpu.matmul %7, %2, %cst {dimension_numbers = #tpu.dot_dimension_numbers<[1], [0], [0], [1], [0, 0, 1, 1], [], []>} : vector<128x128xf32>, vector<128x128xf32>, vector<128x128xf32> -> vector<128x128xf32>
    %c0_5 = arith.constant 0 : index
    %c0_6 = arith.constant 0 : index
    %9 = vector.load %arg4[%c0_5, %c0_6] : memref<128x128xf32, #tpu.memory_space<vmem>>, vector<128x128xf32>
    tpu.vector_store %arg4[%c0_5, %c0_6], %8 {strides = array<i32>} : memref<128x128xf32, #tpu.memory_space<vmem>>, vector<128x128xf32>,
    %cst_7 = arith.constant dense<0xFF800000> : vector<128xf32>
    %10 = vector.multi_reduction <maximumf>, %8, %cst_7 [1] : vector<128x128xf32> to vector<128xf32>
    %11 = vector.shape_cast %10 : vector<128xf32> to vector<128x1xf32>
    %12 = vector.broadcast %11 : vector<128x1xf32> to vector<128x128xf32>
    %13 = arith.subf %8, %12 : vector<128x128xf32>
    %14 = math.exp %13 : vector<128x128xf32>
    %cst_8 = arith.constant dense<0.000000e+00> : vector<128xf32>
    %15 = vector.multi_reduction <add>, %14, %cst_8 [1] : vector<128x128xf32> to vector<128xf32>
    %16 = vector.shape_cast %15 : vector<128xf32> to vector<128x1xf32>
    %17 = math.log %16 : vector<128x1xf32>
    %18 = arith.addf %17, %11 : vector<128x1xf32>
    %19 = vector.broadcast %1 : vector<128x1xi32> to vector<128x128xi32>
    %20 = arith.cmpi eq, %3, %19 : vector<128x128xi32>
    %21 = arith.extui %20 : vector<128x128xi1> to vector<128x128xi32>
    %22 = arith.sitofp %21 : vector<128x128xi32> to vector<128x128xf32>
    %23 = arith.mulf %8, %22 : vector<128x128xf32>
    %cst_9 = arith.constant dense<0.000000e+00> : vector<128xf32>
    %24 = vector.multi_reduction <add>, %23, %cst_9 [1] : vector<128x128xf32> to vector<128xf32>
    %25 = vector.shape_cast %24 : vector<128xf32> to vector<128x1xf32>
    %26 = arith.subf %18, %25 : vector<128x1xf32>
    %c0_10 = arith.constant 0 : index
    %c0_11 = arith.constant 0 : index
    %27 = vector.load %arg5[%c0_10, %c0_11] : memref<128x1xf32, #tpu.memory_space<vmem>>, vector<128x1xf32>
    tpu.vector_store %arg5[%c0_10, %c0_11], %26 {strides = array<i32>} : memref<128x1xf32, #tpu.memory_space<vmem>>, vector<128x1xf32>,
    return
  }
  func.func @transform_0(%arg0: i32) -> (i32, i32) {
    %c0_i32 = arith.constant 0 : i32
    %c0_i32_0 = arith.constant 0 : i32
    return %arg0, %c0_i32 : i32, i32
  }
  func.func @transform_1(%arg0: i32) -> (i32, i32) {
    %c0_i32 = arith.constant 0 : i32
    %c0_i32_0 = arith.constant 0 : i32
    return %arg0, %c0_i32 : i32, i32
  }
  func.func @transform_2(%arg0: i32) -> (i32, i32) {
    %c0_i32 = arith.constant 0 : i32
    %c0_i32_0 = arith.constant 0 : i32
    %c0_i32_1 = arith.constant 0 : i32
    return %c0_i32, %c0_i32_0 : i32, i32
  }
  func.func @transform_3(%arg0: i32) -> (i32, i32) {
    %c0_i32 = arith.constant 0 : i32
    %c0_i32_0 = arith.constant 0 : i32
    return %arg0, %c0_i32 : i32, i32
  }
  func.func @transform_4(%arg0: i32) -> (i32, i32) {
    %c0_i32 = arith.constant 0 : i32
    %c0_i32_0 = arith.constant 0 : i32
    return %arg0, %c0_i32 : i32, i32
  }
}

</mosaic_0001>

<llo_original>
// kernel: tpu_custom_call.1
$region0: #{tpu_custom_call.1}
  #allocation0 [shape = 'u32[]', space=smem, size = 0x4, offset = 0x4, fixed_abs, tag = 'smem constant byte address 0x4 - core index']
  #allocation1 [shape = 'u32[144,128]{1,0:T(1,128)}', space=vmem, size = 0x12000, scoped, tag = 'internal scratch']
  %s0 = inlined_call_operand.vmem [shape: s32[128,1], index: 0, kind: input, shape index: {}]
  %s1 = inlined_call_operand.vmem [shape: s32[128,1], index: 1, kind: input, shape index: {}]
  %s2 = inlined_call_operand.vmem [shape: f32[128,128], index: 2, kind: input, shape index: {}]
  %s3 = inlined_call_operand.hbm [shape: f32[128,128], index: 3, kind: output, shape index: {0}]
  %s4 = inlined_call_operand.vmem [shape: f32[128,1], index: 4, kind: output, shape index: {1}]
  %5 = xla_tuple %s3, %s4
  %s6 = sld [smem:[#allocation0]]
  $region30: #{tpu_custom_call.1} parent=0
    _
  %s8 = ssub.s32 1, %s6
  %s9 = scalar_select 0, %s8, %s6
  $region1: #{tpu_custom_call.1} parent=0
    #allocation2 [shape = 'u8[65536]{0}', space=vmem, size = 0x10000, scoped, tag = 'output window, operand 0, single buffered']
    #allocation3 [shape = 's32[1]{0}', space=sflag, size = 0x4, scoped, tag = 'scoped memory for tpu_custom_call.1']
    %10 = vsyncpa [#allocation3], 0
    // Predicated region
    $region2: #{tpu_custom_call.1} parent=1 // pred_check
      _
    $region3: #{tpu_custom_call.1} parent=1 // pred_check_branch
      %12 = sbr.rel (0) target = $region5
    $region4: #{tpu_custom_call.1} parent=1 // pred_region
      _
    $region5: #{tpu_custom_call.1} parent=1 // pred_fallthru
      _
    // Predicated region
    $region6: #{tpu_custom_call.1} parent=1 // pred_check
      _
    $region7: #{tpu_custom_call.1} parent=1 // pred_check_branch
      %14 = sbr.rel (0) target = $region9
    $region8: #{tpu_custom_call.1} parent=1 // pred_region
      _
    $region9: #{tpu_custom_call.1} parent=1 // pred_fallthru
      _
    // Predicated region
    $region10: #{tpu_custom_call.1} parent=1 // pred_check
      _
    $region11: #{tpu_custom_call.1} parent=1 // pred_check_branch
      %16 = sbr.rel (0) target = $region13
    $region12: #{tpu_custom_call.1} parent=1 // pred_region
      _
    $region13: #{tpu_custom_call.1} parent=1 // pred_fallthru
      _
    %v17 = vld [vmem:[%s0] sm:$0xff]
    %v18 = vld [vmem:[%s0 + $0x8] sm:$0xff]
    %v19 = vld [vmem:[%s0 + $0x10] sm:$0xff]
    %v20 = vld [vmem:[%s0 + $0x18] sm:$0xff]
    %v21 = vld [vmem:[%s0 + $0x20] sm:$0xff]
    %v22 = vld [vmem:[%s0 + $0x28] sm:$0xff]
    %v23 = vld [vmem:[%s0 + $0x30] sm:$0xff]
    %v24 = vld [vmem:[%s0 + $0x38] sm:$0xff]
    %v25 = vld [vmem:[%s0 + $0x40] sm:$0xff]
    %v26 = vld [vmem:[%s0 + $0x48] sm:$0xff]
    %v27 = vld [vmem:[%s0 + $0x50] sm:$0xff]
    %v28 = vld [vmem:[%s0 + $0x58] sm:$0xff]
    %v29 = vld [vmem:[%s0 + $0x60] sm:$0xff]
    %v30 = vld [vmem:[%s0 + $0x68] sm:$0xff]
    %v31 = vld [vmem:[%s0 + $0x70] sm:$0xff]
    %v32 = vld [vmem:[%s0 + $0x78] sm:$0xff]
    %v33 = vld [vmem:[%s1] sm:$0xff]
    %v34 = vld [vmem:[%s1 + $0x8] sm:$0xff]
    %v35 = vld [vmem:[%s1 + $0x10] sm:$0xff]
    %v36 = vld [vmem:[%s1 + $0x18] sm:$0xff]
    %v37 = vld [vmem:[%s1 + $0x20] sm:$0xff]
    %v38 = vld [vmem:[%s1 + $0x28] sm:$0xff]
    %v39 = vld [vmem:[%s1 + $0x30] sm:$0xff]
    %v40 = vld [vmem:[%s1 + $0x38] sm:$0xff]
    %v41 = vld [vmem:[%s1 + $0x40] sm:$0xff]
    %v42 = vld [vmem:[%s1 + $0x48] sm:$0xff]
    %v43 = vld [vmem:[%s1 + $0x50] sm:$0xff]
    %v44 = vld [vmem:[%s1 + $0x58] sm:$0xff]
    %v45 = vld [vmem:[%s1 + $0x60] sm:$0xff]
    %v46 = vld [vmem:[%s1 + $0x68] sm:$0xff]
    %v47 = vld [vmem:[%s1 + $0x70] sm:$0xff]
    %v48 = vld [vmem:[%s1 + $0x78] sm:$0xff]
    %v49 = vld [vmem:[%s2] sm:$0xff]
    %v50 = vld [vmem:[%s2 + $0x8] sm:$0xff]
    %v51 = vld [vmem:[%s2 + $0x10] sm:$0xff]
    %v52 = vld [vmem:[%s2 + $0x18] sm:$0xff]
    %v53 = vld [vmem:[%s2 + $0x20] sm:$0xff]
    %v54 = vld [vmem:[%s2 + $0x28] sm:$0xff]
    %v55 = vld [vmem:[%s2 + $0x30] sm:$0xff]
    %v56 = vld [vmem:[%s2 + $0x38] sm:$0xff]
    %v57 = vld [vmem:[%s2 + $0x40] sm:$0xff]
    %v58 = vld [vmem:[%s2 + $0x48] sm:$0xff]
    %v59 = vld [vmem:[%s2 + $0x50] sm:$0xff]
    %v60 = vld [vmem:[%s2 + $0x58] sm:$0xff]
    %v61 = vld [vmem:[%s2 + $0x60] sm:$0xff]
    %v62 = vld [vmem:[%s2 + $0x68] sm:$0xff]
    %v63 = vld [vmem:[%s2 + $0x70] sm:$0xff]
    %v64 = vld [vmem:[%s2 + $0x78] sm:$0xff]
    %v65 = vlaneseq
    %v66 = vand.u32 %v65, 127
    %67 = vset.pattern.permute.xlu0 0
    %68 = vperm.xlu0 %67, %v17
    %v69 = vpop.permute.xlu0 %68
    %70 = vset.pattern.permute.xlu0 0
    %71 = vperm.xlu0 %70, %v18
    %v72 = vpop.permute.xlu0 %71
    %73 = vset.pattern.permute.xlu0 0
    %74 = vperm.xlu0 %73, %v19
    %v75 = vpop.permute.xlu0 %74
    %76 = vset.pattern.permute.xlu0 0
    %77 = vperm.xlu0 %76, %v20
    %v78 = vpop.permute.xlu0 %77
    %79 = vset.pattern.permute.xlu0 0
    %80 = vperm.xlu0 %79, %v21
    %v81 = vpop.permute.xlu0 %80
    %82 = vset.pattern.permute.xlu0 0
    %83 = vperm.xlu0 %82, %v22
    %v84 = vpop.permute.xlu0 %83
    %85 = vset.pattern.permute.xlu0 0
    %86 = vperm.xlu0 %85, %v23
    %v87 = vpop.permute.xlu0 %86
    %88 = vset.pattern.permute.xlu0 0
    %89 = vperm.xlu0 %88, %v24
    %v90 = vpop.permute.xlu0 %89
    %91 = vset.pattern.permute.xlu0 0
    %92 = vperm.xlu0 %91, %v25
    %v93 = vpop.permute.xlu0 %92
    %94 = vset.pattern.permute.xlu0 0
    %95 = vperm.xlu0 %94, %v26
    %v96 = vpop.permute.xlu0 %95
    %97 = vset.pattern.permute.xlu0 0
    %98 = vperm.xlu0 %97, %v27
    %v99 = vpop.permute.xlu0 %98
    %100 = vset.pattern.permute.xlu0 0
    %101 = vperm.xlu0 %100, %v28
    %v102 = vpop.permute.xlu0 %101
    %103 = vset.pattern.permute.xlu0 0
    %104 = vperm.xlu0 %103, %v29
    %v105 = vpop.permute.xlu0 %104
    %106 = vset.pattern.permute.xlu0 0
    %107 = vperm.xlu0 %106, %v30
    %v108 = vpop.permute.xlu0 %107
    %109 = vset.pattern.permute.xlu0 0
    %110 = vperm.xlu0 %109, %v31
    %v111 = vpop.permute.xlu0 %110
    %112 = vset.pattern.permute.xlu0 0
    %113 = vperm.xlu0 %112, %v32
    %v114 = vpop.permute.xlu0 %113
    %vm115 = vcmp.eq.s32.totalorder %v66, %v69
    %vm116 = vcmp.eq.s32.totalorder %v66, %v72
    %vm117 = vcmp.eq.s32.totalorder %v66, %v75
    %vm118 = vcmp.eq.s32.totalorder %v66, %v78
    %vm119 = vcmp.eq.s32.totalorder %v66, %v81
    %vm120 = vcmp.eq.s32.totalorder %v66, %v84
    %vm121 = vcmp.eq.s32.totalorder %v66, %v87
    %vm122 = vcmp.eq.s32.totalorder %v66, %v90
    %vm123 = vcmp.eq.s32.totalorder %v66, %v93
    %vm124 = vcmp.eq.s32.totalorder %v66, %v96
    %vm125 = vcmp.eq.s32.totalorder %v66, %v99
    %vm126 = vcmp.eq.s32.totalorder %v66, %v102
    %vm127 = vcmp.eq.s32.totalorder %v66, %v105
    %vm128 = vcmp.eq.s32.totalorder %v66, %v108
    %vm129 = vcmp.eq.s32.totalorder %v66, %v111
    %vm130 = vcmp.eq.s32.totalorder %v66, %v114
    %v131 = vsel %vm115, 1, 0
    %v132 = vsel %vm116, 1, 0
    %v133 = vsel %vm117, 1, 0
    %v134 = vsel %vm118, 1, 0
    %v135 = vsel %vm119, 1, 0
    %v136 = vsel %vm120, 1, 0
    %v137 = vsel %vm121, 1, 0
    %v138 = vsel %vm122, 1, 0
    %v139 = vsel %vm123, 1, 0
    %v140 = vsel %vm124, 1, 0
    %v141 = vsel %vm125, 1, 0
    %v142 = vsel %vm126, 1, 0
    %v143 = vsel %vm127, 1, 0
    %v144 = vsel %vm128, 1, 0
    %v145 = vsel %vm129, 1, 0
    %v146 = vsel %vm130, 1, 0
    %v147 = vcvt.s32.f32 %v131
    %v148 = vcvt.s32.f32 %v132
    %v149 = vcvt.s32.f32 %v133
    %v150 = vcvt.s32.f32 %v134
    %v151 = vcvt.s32.f32 %v135
    %v152 = vcvt.s32.f32 %v136
    %v153 = vcvt.s32.f32 %v137
    %v154 = vcvt.s32.f32 %v138
    %v155 = vcvt.s32.f32 %v139
    %v156 = vcvt.s32.f32 %v140
    %v157 = vcvt.s32.f32 %v141
    %v158 = vcvt.s32.f32 %v142
    %v159 = vcvt.s32.f32 %v143
    %v160 = vcvt.s32.f32 %v144
    %v161 = vcvt.s32.f32 %v145
    %v162 = vcvt.s32.f32 %v146
    %163 = vmatprep.subr.mxu0 0.0
    %164 = vmatpush1.msra.mxu0 %v49
    %165 = vmatprep.subr.mxu0 0.0
    %166 = vmatpush1.msra.mxu0 %v50
    %167 = vmatprep.subr.mxu0 0.0
    %168 = vmatpush1.msra.mxu0 %v51
    %169 = vmatprep.subr.mxu0 0.0
    %170 = vmatpush1.msra.mxu0 %v52
    %171 = vmatprep.subr.mxu0 0.0
    %172 = vmatpush1.msra.mxu0 %v53
    %173 = vmatprep.subr.mxu0 0.0
    %174 = vmatpush1.msra.mxu0 %v54
    %175 = vmatprep.subr.mxu0 0.0
    %176 = vmatpush1.msra.mxu0 %v55
    %177 = vmatprep.subr.mxu0 0.0
    %178 = vmatpush1.msra.mxu0 %v56
    %179 = vmatprep.subr.mxu0 0.0
    %180 = vmatpush1.msra.mxu0 %v57
    %181 = vmatprep.subr.mxu0 0.0
    %182 = vmatpush1.msra.mxu0 %v58
    %183 = vmatprep.subr.mxu0 0.0
    %184 = vmatpush1.msra.mxu0 %v59
    %185 = vmatprep.subr.mxu0 0.0
    %186 = vmatpush1.msra.mxu0 %v60
    %187 = vmatprep.subr.mxu0 0.0
    %188 = vmatpush1.msra.mxu0 %v61
    %189 = vmatprep.subr.mxu0 0.0
    %190 = vmatpush1.msra.mxu0 %v62
    %191 = vmatprep.subr.mxu0 0.0
    %192 = vmatpush1.msra.mxu0 %v63
    %193 = vmatprep.subr.mxu0 0.0
    %194 = vmatpush1.msra.mxu0 %v64
    %195 = vmatprep.subr.mxu0 0.0
    %196 = vmatpush1.msra.mxu0 0.0
    %197 = vmatprep.subr.mxu0 0.0
    %198 = vmatpush1.msra.mxu0 0.0
    %199 = vmatprep.subr.mxu0 0.0
    %200 = vmatpush1.msra.mxu0 0.0
    %201 = vmatprep.subr.mxu0 0.0
    %202 = vmatpush1.msra.mxu0 0.0
    %203 = vmatprep.subr.mxu0 0.0
    %204 = vmatpush1.msra.mxu0 0.0
    %205 = vmatprep.subr.mxu0 0.0
    %206 = vmatpush1.msra.mxu0 0.0
    %207 = vmatprep.subr.mxu0 0.0
    %208 = vmatpush1.msra.mxu0 0.0
    %209 = vmatprep.subr.mxu0 0.0
    %210 = vmatpush1.msra.mxu0 0.0
    %211 = vmatprep.subr.mxu0 0.0
    %212 = vmatpush1.msra.mxu0 0.0
    %213 = vmatprep.subr.mxu0 0.0
    %214 = vmatpush1.msra.mxu0 0.0
    %215 = vmatprep.subr.mxu0 0.0
    %216 = vmatpush1.msra.mxu0 0.0
    %217 = vmatprep.subr.mxu0 0.0
    %218 = vmatpush1.msra.mxu0 0.0
    %219 = vmatprep.subr.mxu0 0.0
    %220 = vmatpush1.msra.mxu0 0.0
    %221 = vmatprep.subr.mxu0 0.0
    %222 = vmatpush1.msra.mxu0 0.0
    %223 = vmatprep.subr.mxu0 0.0
    %224 = vmatpush1.msra.mxu0 0.0
    %225 = vmatprep.subr.mxu0 0.0
    %226 = vmatpush1.msra.mxu0 0.0
    %227 = vmatprep.mubr.f32.mxu0 0.0
    %228 = vmatmul.mubr.f32.gmra.mrb[0].mxu0 %v147
    %v229 = vpop.f32.mrb[0].mxu0
    %v230 = vadd.f32 0.0, %v229
    %v231 = vpop.f32.mrb[0].mxu0
    %232 = vmatprep.mubr.f32.mxu0 0.0
    %233 = vmatmul.mubr.f32.gmra.mrb[0].mxu0 %v148
    %v234 = vpop.f32.mrb[0].mxu0
    %v235 = vadd.f32 0.0, %v234
    %v236 = vpop.f32.mrb[0].mxu0
    %237 = vmatprep.mubr.f32.mxu0 0.0
    %238 = vmatmul.mubr.f32.gmra.mrb[0].mxu0 %v149
    %v239 = vpop.f32.mrb[0].mxu0
    %v240 = vadd.f32 0.0, %v239
    %v241 = vpop.f32.mrb[0].mxu0
    %242 = vmatprep.mubr.f32.mxu0 0.0
    %243 = vmatmul.mubr.f32.gmra.mrb[0].mxu0 %v150
    %v244 = vpop.f32.mrb[0].mxu0
    %v245 = vadd.f32 0.0, %v244
    %v246 = vpop.f32.mrb[0].mxu0
    %247 = vmatprep.mubr.f32.mxu0 0.0
    %248 = vmatmul.mubr.f32.gmra.mrb[0].mxu0 %v151
    %v249 = vpop.f32.mrb[0].mxu0
    %v250 = vadd.f32 0.0, %v249
    %v251 = vpop.f32.mrb[0].mxu0
    %252 = vmatprep.mubr.f32.mxu0 0.0
    %253 = vmatmul.mubr.f32.gmra.mrb[0].mxu0 %v152
    %v254 = vpop.f32.mrb[0].mxu0
    %v255 = vadd.f32 0.0, %v254
    %v256 = vpop.f32.mrb[0].mxu0
    %257 = vmatprep.mubr.f32.mxu0 0.0
    %258 = vmatmul.mubr.f32.gmra.mrb[0].mxu0 %v153
    %v259 = vpop.f32.mrb[0].mxu0
    %v260 = vadd.f32 0.0, %v259
    %v261 = vpop.f32.mrb[0].mxu0
    %262 = vmatprep.mubr.f32.mxu0 0.0
    %263 = vmatmul.mubr.f32.gmra.mrb[0].mxu0 %v154
    %v264 = vpop.f32.mrb[0].mxu0
    %v265 = vadd.f32 0.0, %v264
    %v266 = vpop.f32.mrb[0].mxu0
    %267 = vmatprep.mubr.f32.mxu0 0.0
    %268 = vmatmul.mubr.f32.gmra.mrb[0].mxu0 %v155
    %v269 = vpop.f32.mrb[0].mxu0
    %v270 = vadd.f32 0.0, %v269
    %v271 = vpop.f32.mrb[0].mxu0
    %272 = vmatprep.mubr.f32.mxu0 0.0
    %273 = vmatmul.mubr.f32.gmra.mrb[0].mxu0 %v156
    %v274 = vpop.f32.mrb[0].mxu0
    %v275 = vadd.f32 0.0, %v274
    %v276 = vpop.f32.mrb[0].mxu0
    %277 = vmatprep.mubr.f32.mxu0 0.0
    %278 = vmatmul.mubr.f32.gmra.mrb[0].mxu0 %v157
    %v279 = vpop.f32.mrb[0].mxu0
    %v280 = vadd.f32 0.0, %v279
    %v281 = vpop.f32.mrb[0].mxu0
    %282 = vmatprep.mubr.f32.mxu0 0.0
    %283 = vmatmul.mubr.f32.gmra.mrb[0].mxu0 %v158
    %v284 = vpop.f32.mrb[0].mxu0
    %v285 = vadd.f32 0.0, %v284
    %v286 = vpop.f32.mrb[0].mxu0
    %287 = vmatprep.mubr.f32.mxu0 0.0
    %288 = vmatmul.mubr.f32.gmra.mrb[0].mxu0 %v159
    %v289 = vpop.f32.mrb[0].mxu0
    %v290 = vadd.f32 0.0, %v289
    %v291 = vpop.f32.mrb[0].mxu0
    %292 = vmatprep.mubr.f32.mxu0 0.0
    %293 = vmatmul.mubr.f32.gmra.mrb[0].mxu0 %v160
    %v294 = vpop.f32.mrb[0].mxu0
    %v295 = vadd.f32 0.0, %v294
    %v296 = vpop.f32.mrb[0].mxu0
    %297 = vmatprep.mubr.f32.mxu0 0.0
    %298 = vmatmul.mubr.f32.gmra.mrb[0].mxu0 %v161
    %v299 = vpop.f32.mrb[0].mxu0
    %v300 = vadd.f32 0.0, %v299
    %v301 = vpop.f32.mrb[0].mxu0
    %302 = vmatprep.mubr.f32.mxu0 0.0
    %303 = vmatmul.mubr.f32.gmra.mrb[0].mxu0 %v162
    %v304 = vpop.f32.mrb[0].mxu0
    %v305 = vadd.f32 0.0, %v304
    %v306 = vpop.f32.mrb[0].mxu0
    %307 = vdwg.mxu0
    %308 = vst [vmem:[#allocation2] sm:$0xff] %v230
    %309 = vst [vmem:[#allocation2 + $0x8] sm:$0xff] %v235
    %310 = vst [vmem:[#allocation2 + $0x10] sm:$0xff] %v240
    %311 = vst [vmem:[#allocation2 + $0x18] sm:$0xff] %v245
    %312 = vst [vmem:[#allocation2 + $0x20] sm:$0xff] %v250
    %313 = vst [vmem:[#allocation2 + $0x28] sm:$0xff] %v255
    %314 = vst [vmem:[#allocation2 + $0x30] sm:$0xff] %v260
    %315 = vst [vmem:[#allocation2 + $0x38] sm:$0xff] %v265
    %316 = vst [vmem:[#allocation2 + $0x40] sm:$0xff] %v270
    %317 = vst [vmem:[#allocation2 + $0x48] sm:$0xff] %v275
    %318 = vst [vmem:[#allocation2 + $0x50] sm:$0xff] %v280
    %319 = vst [vmem:[#allocation2 + $0x58] sm:$0xff] %v285
    %320 = vst [vmem:[#allocation2 + $0x60] sm:$0xff] %v290
    %321 = vst [vmem:[#allocation2 + $0x68] sm:$0xff] %v295
    %322 = vst [vmem:[#allocation2 + $0x70] sm:$0xff] %v300
    %323 = vst [vmem:[#allocation2 + $0x78] sm:$0xff] %v305
    %324 = vmax.xlane.f32.xlu0 %v230
    %v325 = vpop.xlane.xlu0 %324
    %326 = vmax.xlane.f32.xlu0 %v235
    %v327 = vpop.xlane.xlu0 %326
    %328 = vmax.xlane.f32.xlu0 %v240
    %v329 = vpop.xlane.xlu0 %328
    %330 = vmax.xlane.f32.xlu0 %v245
    %v331 = vpop.xlane.xlu0 %330
    %332 = vmax.xlane.f32.xlu0 %v250
    %v333 = vpop.xlane.xlu0 %332
    %334 = vmax.xlane.f32.xlu0 %v255
    %v335 = vpop.xlane.xlu0 %334
    %336 = vmax.xlane.f32.xlu0 %v260
    %v337 = vpop.xlane.xlu0 %336
    %338 = vmax.xlane.f32.xlu0 %v265
    %v339 = vpop.xlane.xlu0 %338
    %340 = vmax.xlane.f32.xlu0 %v270
    %v341 = vpop.xlane.xlu0 %340
    %342 = vmax.xlane.f32.xlu0 %v275
    %v343 = vpop.xlane.xlu0 %342
    %344 = vmax.xlane.f32.xlu0 %v280
    %v345 = vpop.xlane.xlu0 %344
    %346 = vmax.xlane.f32.xlu0 %v285
    %v347 = vpop.xlane.xlu0 %346
    %348 = vmax.xlane.f32.xlu0 %v290
    %v349 = vpop.xlane.xlu0 %348
    %350 = vmax.xlane.f32.xlu0 %v295
    %v351 = vpop.xlane.xlu0 %350
    %352 = vmax.xlane.f32.xlu0 %v300
    %v353 = vpop.xlane.xlu0 %352
    %354 = vmax.xlane.f32.xlu0 %v305
    %v355 = vpop.xlane.xlu0 %354
    %v356 = vsub.f32 %v230, %v325
    %v357 = vsub.f32 %v235, %v327
    %v358 = vsub.f32 %v240, %v329
    %v359 = vsub.f32 %v245, %v331
    %v360 = vsub.f32 %v250, %v333
    %v361 = vsub.f32 %v255, %v335
    %v362 = vsub.f32 %v260, %v337
    %v363 = vsub.f32 %v265, %v339
    %v364 = vsub.f32 %v270, %v341
    %v365 = vsub.f32 %v275, %v343
    %v366 = vsub.f32 %v280, %v345
    %v367 = vsub.f32 %v285, %v347
    %v368 = vsub.f32 %v290, %v349
    %v369 = vsub.f32 %v295, %v351
    %v370 = vsub.f32 %v300, %v353
    %v371 = vsub.f32 %v305, %v355
    %v372 = vmul.f32 %v356, 1.442695
    %v373 = vpow.pop %v372
    %v374 = vmul.f32 %v357, 1.442695
    %v375 = vpow.pop %v374
    %v376 = vmul.f32 %v358, 1.442695
    %v377 = vpow.pop %v376
    %v378 = vmul.f32 %v359, 1.442695
    %v379 = vpow.pop %v378
    %v380 = vmul.f32 %v360, 1.442695
    %v381 = vpow.pop %v380
    %v382 = vmul.f32 %v361, 1.442695
    %v383 = vpow.pop %v382
    %v384 = vmul.f32 %v362, 1.442695
    %v385 = vpow.pop %v384
    %v386 = vmul.f32 %v363, 1.442695
    %v387 = vpow.pop %v386
    %v388 = vmul.f32 %v364, 1.442695
    %v389 = vpow.pop %v388
    %v390 = vmul.f32 %v365, 1.442695
    %v391 = vpow.pop %v390
    %v392 = vmul.f32 %v366, 1.442695
    %v393 = vpow.pop %v392
    %v394 = vmul.f32 %v367, 1.442695
    %v395 = vpow.pop %v394
    %v396 = vmul.f32 %v368, 1.442695
    %v397 = vpow.pop %v396
    %v398 = vmul.f32 %v369, 1.442695
    %v399 = vpow.pop %v398
    %v400 = vmul.f32 %v370, 1.442695
    %v401 = vpow.pop %v400
    %v402 = vmul.f32 %v371, 1.442695
    %v403 = vpow.pop %v402
    %404 = vadd.xlane.f32.xlu0 %v373
    %v405 = vpop.xlane.xlu0 %404
    %406 = vadd.xlane.f32.xlu0 %v375
    %v407 = vpop.xlane.xlu0 %406
    %408 = vadd.xlane.f32.xlu0 %v377
    %v409 = vpop.xlane.xlu0 %408
    %410 = vadd.xlane.f32.xlu0 %v379
    %v411 = vpop.xlane.xlu0 %410
    %412 = vadd.xlane.f32.xlu0 %v381
    %v413 = vpop.xlane.xlu0 %412
    %414 = vadd.xlane.f32.xlu0 %v383
    %v415 = vpop.xlane.xlu0 %414
    %416 = vadd.xlane.f32.xlu0 %v385
    %v417 = vpop.xlane.xlu0 %416
    %418 = vadd.xlane.f32.xlu0 %v387
    %v419 = vpop.xlane.xlu0 %418
    %420 = vadd.xlane.f32.xlu0 %v389
    %v421 = vpop.xlane.xlu0 %420
    %422 = vadd.xlane.f32.xlu0 %v391
    %v423 = vpop.xlane.xlu0 %422
    %424 = vadd.xlane.f32.xlu0 %v393
    %v425 = vpop.xlane.xlu0 %424
    %426 = vadd.xlane.f32.xlu0 %v395
    %v427 = vpop.xlane.xlu0 %426
    %428 = vadd.xlane.f32.xlu0 %v397
    %v429 = vpop.xlane.xlu0 %428
    %430 = vadd.xlane.f32.xlu0 %v399
    %v431 = vpop.xlane.xlu0 %430
    %432 = vadd.xlane.f32.xlu0 %v401
    %v433 = vpop.xlane.xlu0 %432
    %434 = vadd.xlane.f32.xlu0 %v403
    %v435 = vpop.xlane.xlu0 %434
    %v436 = vlog2.pop %v405
    %v437 = vmul.f32 %v436, 0.6931472
    %v438 = vlog2.pop %v407
    %v439 = vmul.f32 %v438, 0.6931472
    %v440 = vlog2.pop %v409
    %v441 = vmul.f32 %v440, 0.6931472
    %v442 = vlog2.pop %v411
    %v443 = vmul.f32 %v442, 0.6931472
    %v444 = vlog2.pop %v413
    %v445 = vmul.f32 %v444, 0.6931472
    %v446 = vlog2.pop %v415
    %v447 = vmul.f32 %v446, 0.6931472
    %v448 = vlog2.pop %v417
    %v449 = vmul.f32 %v448, 0.6931472
    %v450 = vlog2.pop %v419
    %v451 = vmul.f32 %v450, 0.6931472
    %v452 = vlog2.pop %v421
    %v453 = vmul.f32 %v452, 0.6931472
    %v454 = vlog2.pop %v423
    %v455 = vmul.f32 %v454, 0.6931472
    %v456 = vlog2.pop %v425
    %v457 = vmul.f32 %v456, 0.6931472
    %v458 = vlog2.pop %v427
    %v459 = vmul.f32 %v458, 0.6931472
    %v460 = vlog2.pop %v429
    %v461 = vmul.f32 %v460, 0.6931472
    %v462 = vlog2.pop %v431
    %v463 = vmul.f32 %v462, 0.6931472
    %v464 = vlog2.pop %v433
    %v465 = vmul.f32 %v464, 0.6931472
    %v466 = vlog2.pop %v435
    %v467 = vmul.f32 %v466, 0.6931472
    %v468 = vadd.f32 %v437, %v325
    %v469 = vadd.f32 %v439, %v327
    %v470 = vadd.f32 %v441, %v329
    %v471 = vadd.f32 %v443, %v331
    %v472 = vadd.f32 %v445, %v333
    %v473 = vadd.f32 %v447, %v335
    %v474 = vadd.f32 %v449, %v337
    %v475 = vadd.f32 %v451, %v339
    %v476 = vadd.f32 %v453, %v341
    %v477 = vadd.f32 %v455, %v343
    %v478 = vadd.f32 %v457, %v345
    %v479 = vadd.f32 %v459, %v347
    %v480 = vadd.f32 %v461, %v349
    %v481 = vadd.f32 %v463, %v351
    %v482 = vadd.f32 %v465, %v353
    %v483 = vadd.f32 %v467, %v355
    %484 = vset.pattern.permute.xlu0 0
    %485 = vperm.xlu0 %484, %v33
    %v486 = vpop.permute.xlu0 %485
    %487 = vset.pattern.permute.xlu0 0
    %488 = vperm.xlu0 %487, %v34
    %v489 = vpop.permute.xlu0 %488
    %490 = vset.pattern.permute.xlu0 0
    %491 = vperm.xlu0 %490, %v35
    %v492 = vpop.permute.xlu0 %491
    %493 = vset.pattern.permute.xlu0 0
    %494 = vperm.xlu0 %493, %v36
    %v495 = vpop.permute.xlu0 %494
    %496 = vset.pattern.permute.xlu0 0
    %497 = vperm.xlu0 %496, %v37
    %v498 = vpop.permute.xlu0 %497
    %499 = vset.pattern.permute.xlu0 0
    %500 = vperm.xlu0 %499, %v38
    %v501 = vpop.permute.xlu0 %500
    %502 = vset.pattern.permute.xlu0 0
    %503 = vperm.xlu0 %502, %v39
    %v504 = vpop.permute.xlu0 %503
    %505 = vset.pattern.permute.xlu0 0
    %506 = vperm.xlu0 %505, %v40
    %v507 = vpop.permute.xlu0 %506
    %508 = vset.pattern.permute.xlu0 0
    %509 = vperm.xlu0 %508, %v41
    %v510 = vpop.permute.xlu0 %509
    %511 = vset.pattern.permute.xlu0 0
    %512 = vperm.xlu0 %511, %v42
    %v513 = vpop.permute.xlu0 %512
    %514 = vset.pattern.permute.xlu0 0
    %515 = vperm.xlu0 %514, %v43
    %v516 = vpop.permute.xlu0 %515
    %517 = vset.pattern.permute.xlu0 0
    %518 = vperm.xlu0 %517, %v44
    %v519 = vpop.permute.xlu0 %518
    %520 = vset.pattern.permute.xlu0 0
    %521 = vperm.xlu0 %520, %v45
    %v522 = vpop.permute.xlu0 %521
    %523 = vset.pattern.permute.xlu0 0
    %524 = vperm.xlu0 %523, %v46
    %v525 = vpop.permute.xlu0 %524
    %526 = vset.pattern.permute.xlu0 0
    %527 = vperm.xlu0 %526, %v47
    %v528 = vpop.permute.xlu0 %527
    %529 = vset.pattern.permute.xlu0 0
    %530 = vperm.xlu0 %529, %v48
    %v531 = vpop.permute.xlu0 %530
    %vm532 = vcmp.eq.s32.totalorder %v66, %v486
    %vm533 = vcmp.eq.s32.totalorder %v66, %v489
    %vm534 = vcmp.eq.s32.totalorder %v66, %v492
    %vm535 = vcmp.eq.s32.totalorder %v66, %v495
    %vm536 = vcmp.eq.s32.totalorder %v66, %v498
    %vm537 = vcmp.eq.s32.totalorder %v66, %v501
    %vm538 = vcmp.eq.s32.totalorder %v66, %v504
    %vm539 = vcmp.eq.s32.totalorder %v66, %v507
    %vm540 = vcmp.eq.s32.totalorder %v66, %v510
    %vm541 = vcmp.eq.s32.totalorder %v66, %v513
    %vm542 = vcmp.eq.s32.totalorder %v66, %v516
    %vm543 = vcmp.eq.s32.totalorder %v66, %v519
    %vm544 = vcmp.eq.s32.totalorder %v66, %v522
    %vm545 = vcmp.eq.s32.totalorder %v66, %v525
    %vm546 = vcmp.eq.s32.totalorder %v66, %v528
    %vm547 = vcmp.eq.s32.totalorder %v66, %v531
    %v548 = vsel %vm532, 1, 0
    %v549 = vsel %vm533, 1, 0
    %v550 = vsel %vm534, 1, 0
    %v551 = vsel %vm535, 1, 0
    %v552 = vsel %vm536, 1, 0
    %v553 = vsel %vm537, 1, 0
    %v554 = vsel %vm538, 1, 0
    %v555 = vsel %vm539, 1, 0
    %v556 = vsel %vm540, 1, 0
    %v557 = vsel %vm541, 1, 0
    %v558 = vsel %vm542, 1, 0
    %v559 = vsel %vm543, 1, 0
    %v560 = vsel %vm544, 1, 0
    %v561 = vsel %vm545, 1, 0
    %v562 = vsel %vm546, 1, 0
    %v563 = vsel %vm547, 1, 0
    %v564 = vcvt.s32.f32 %v548
    %v565 = vcvt.s32.f32 %v549
    %v566 = vcvt.s32.f32 %v550
    %v567 = vcvt.s32.f32 %v551
    %v568 = vcvt.s32.f32 %v552
    %v569 = vcvt.s32.f32 %v553
    %v570 = vcvt.s32.f32 %v554
    %v571 = vcvt.s32.f32 %v555
    %v572 = vcvt.s32.f32 %v556
    %v573 = vcvt.s32.f32 %v557
    %v574 = vcvt.s32.f32 %v558
    %v575 = vcvt.s32.f32 %v559
    %v576 = vcvt.s32.f32 %v560
    %v577 = vcvt.s32.f32 %v561
    %v578 = vcvt.s32.f32 %v562
    %v579 = vcvt.s32.f32 %v563
    %v580 = vmul.f32 %v230, %v564
    %v581 = vmul.f32 %v235, %v565
    %v582 = vmul.f32 %v240, %v566
    %v583 = vmul.f32 %v245, %v567
    %v584 = vmul.f32 %v250, %v568
    %v585 = vmul.f32 %v255, %v569
    %v586 = vmul.f32 %v260, %v570
    %v587 = vmul.f32 %v265, %v571
    %v588 = vmul.f32 %v270, %v572
    %v589 = vmul.f32 %v275, %v573
    %v590 = vmul.f32 %v280, %v574
    %v591 = vmul.f32 %v285, %v575
    %v592 = vmul.f32 %v290, %v576
    %v593 = vmul.f32 %v295, %v577
    %v594 = vmul.f32 %v300, %v578
    %v595 = vmul.f32 %v305, %v579
    %596 = vadd.xlane.f32.xlu0 %v580
    %v597 = vpop.xlane.xlu0 %596
    %598 = vadd.xlane.f32.xlu0 %v581
    %v599 = vpop.xlane.xlu0 %598
    %600 = vadd.xlane.f32.xlu0 %v582
    %v601 = vpop.xlane.xlu0 %600
    %602 = vadd.xlane.f32.xlu0 %v583
    %v603 = vpop.xlane.xlu0 %602
    %604 = vadd.xlane.f32.xlu0 %v584
    %v605 = vpop.xlane.xlu0 %604
    %606 = vadd.xlane.f32.xlu0 %v585
    %v607 = vpop.xlane.xlu0 %606
    %608 = vadd.xlane.f32.xlu0 %v586
    %v609 = vpop.xlane.xlu0 %608
    %610 = vadd.xlane.f32.xlu0 %v587
    %v611 = vpop.xlane.xlu0 %610
    %612 = vadd.xlane.f32.xlu0 %v588
    %v613 = vpop.xlane.xlu0 %612
    %614 = vadd.xlane.f32.xlu0 %v589
    %v615 = vpop.xlane.xlu0 %614
    %616 = vadd.xlane.f32.xlu0 %v590
    %v617 = vpop.xlane.xlu0 %616
    %618 = vadd.xlane.f32.xlu0 %v591
    %v619 = vpop.xlane.xlu0 %618
    %620 = vadd.xlane.f32.xlu0 %v592
    %v621 = vpop.xlane.xlu0 %620
    %622 = vadd.xlane.f32.xlu0 %v593
    %v623 = vpop.xlane.xlu0 %622
    %624 = vadd.xlane.f32.xlu0 %v594
    %v625 = vpop.xlane.xlu0 %624
    %626 = vadd.xlane.f32.xlu0 %v595
    %v627 = vpop.xlane.xlu0 %626
    %v628 = vsub.f32 %v468, %v597
    %v629 = vsub.f32 %v469, %v599
    %v630 = vsub.f32 %v470, %v601
    %v631 = vsub.f32 %v471, %v603
    %v632 = vsub.f32 %v472, %v605
    %v633 = vsub.f32 %v473, %v607
    %v634 = vsub.f32 %v474, %v609
    %v635 = vsub.f32 %v475, %v611
    %v636 = vsub.f32 %v476, %v613
    %v637 = vsub.f32 %v477, %v615
    %v638 = vsub.f32 %v478, %v617
    %v639 = vsub.f32 %v479, %v619
    %v640 = vsub.f32 %v480, %v621
    %v641 = vsub.f32 %v481, %v623
    %v642 = vsub.f32 %v482, %v625
    %v643 = vsub.f32 %v483, %v627
    %vm644 = vcmask 7168
    %645 = vst.msk [vmem:[%s4] sm:$0xff] %vm644, %v628
    %646 = vst.msk [vmem:[%s4 + $0x8] sm:$0xff] %vm644, %v629
    %647 = vst.msk [vmem:[%s4 + $0x10] sm:$0xff] %vm644, %v630
    %648 = vst.msk [vmem:[%s4 + $0x18] sm:$0xff] %vm644, %v631
    %649 = vst.msk [vmem:[%s4 + $0x20] sm:$0xff] %vm644, %v632
    %650 = vst.msk [vmem:[%s4 + $0x28] sm:$0xff] %vm644, %v633
    %651 = vst.msk [vmem:[%s4 + $0x30] sm:$0xff] %vm644, %v634
    %652 = vst.msk [vmem:[%s4 + $0x38] sm:$0xff] %vm644, %v635
    %653 = vst.msk [vmem:[%s4 + $0x40] sm:$0xff] %vm644, %v636
    %654 = vst.msk [vmem:[%s4 + $0x48] sm:$0xff] %vm644, %v637
    %655 = vst.msk [vmem:[%s4 + $0x50] sm:$0xff] %vm644, %v638
    %656 = vst.msk [vmem:[%s4 + $0x58] sm:$0xff] %vm644, %v639
    %657 = vst.msk [vmem:[%s4 + $0x60] sm:$0xff] %vm644, %v640
    %658 = vst.msk [vmem:[%s4 + $0x68] sm:$0xff] %vm644, %v641
    %659 = vst.msk [vmem:[%s4 + $0x70] sm:$0xff] %vm644, %v642
    %660 = vst.msk [vmem:[%s4 + $0x78] sm:$0xff] %vm644, %v643
    // Predicated region
    $region14: #{tpu_custom_call.1} parent=1 // pred_check
      _
    $region15: #{tpu_custom_call.1} parent=1 // pred_check_branch
      %662 = sbr.rel (0) target = $region17
    $region16: #{tpu_custom_call.1} parent=1 // pred_region
      %s664 = ssub.s32 2048, 2048
      %665 = vsyncadd [#allocation3], %s664
      %s666 = sshll.u32 [#allocation2], 4
      %s667 = int_to_ptr.vmem [resolvable:$true] %s666
      %672 = dma.vmem_to_hbm [thread:$0]  %s667, 2048, %s3, [#allocation3], 128, 128, 8
    $region17: #{tpu_custom_call.1} parent=1 // pred_fallthru
      _
    // Predicated region
    $region18: #{tpu_custom_call.1} parent=1 // pred_check
      _
    $region19: #{tpu_custom_call.1} parent=1 // pred_check_branch
      %674 = sbr.rel (0) target = $region21
    $region20: #{tpu_custom_call.1} parent=1 // pred_region
      _
    $region21: #{tpu_custom_call.1} parent=1 // pred_fallthru
      _
    // Predicated region
    $region22: #{tpu_custom_call.1} parent=1 // pred_check
      _
    $region23: #{tpu_custom_call.1} parent=1 // pred_check_branch
      %676 = sbr.rel (0) target = $region25
    $region24: #{tpu_custom_call.1} parent=1 // pred_region
      %677 = dma.done [#allocation3], 2048
    $region25: #{tpu_custom_call.1} parent=1 // pred_fallthru
      _
    // Predicated region
    $region26: #{tpu_custom_call.1} parent=1 // pred_check
      _
    $region27: #{tpu_custom_call.1} parent=1 // pred_check_branch
      %679 = sbr.rel (0) target = $region29
    $region28: #{tpu_custom_call.1} parent=1 // pred_region
      _
    $region29: #{tpu_custom_call.1} parent=1 // pred_fallthru
      _
    %680 = vsyncpa [#allocation3], 1

</llo_original>
